<compile_context>
chip_gen: v7x
topology: tpu7x:2x2x1
jax: 0.10.0
libtpu: 0.0.40
codegen_flags: <defaults>
</compile_context>

<pallas_src>
import jax
import jax.numpy as jnp
from jax import lax
from jax.experimental import pallas as pl
from jax.experimental.pallas import tpu as pltpu  # noqa: F401  (imported per harness template)

# ---- model hyper-parameters (small, consistent with the module) ----
D_MODEL = 32
N_HEAD = 4
HEAD_DIM = D_MODEL // N_HEAD
SEQ = 8
BATCH = 2
EPS = 1e-5  # torch.nn.LayerNorm default


def _layer_norm(x, g, b):
    # fp32 layer-norm over the last dim (matches the fp16-safe LayerNorm subclass)
    mu = jnp.mean(x, axis=-1, keepdims=True)
    var = jnp.mean(jnp.square(x - mu), axis=-1, keepdims=True)
    return (x - mu) * lax.rsqrt(var + EPS) * g + b


def residual_block_kernel(
    x_ref,                      # (R, D)   R = L*N rows; row r = (l=r//N, n=r%N)
    ln1_g_ref, ln1_b_ref,       # (1, D)
    w_qkv_ref, b_qkv_ref,       # (D, 3D), (1, 3D)  q-columns pre-scaled by 1/sqrt(hd)
    w_out_ref, b_out_ref,       # (D, D), (1, D)
    ln2_g_ref, ln2_b_ref,       # (1, D)
    w_fc_ref, b_fc_ref,         # (D, 4D), (1, 4D)
    w_proj_ref, b_proj_ref,     # (4D, D), (1, D)
    hmask_ref,                  # (H, D) 0/1 head-column selection masks
    bmask_ref,                  # (H*R, R) additive batch mask (0 / -1e30)
    o_ref,                      # (R, D)
):
    R, D = x_ref.shape
    x = x_ref[...].astype(jnp.float32)

    # ---------------- ln_1 (fp32) ----------------
    xn = _layer_norm(x, ln1_g_ref[...], ln1_b_ref[...])

    # ---------------- fused QKV projection (single MXU push) ----------------
    qkv = jnp.dot(xn, w_qkv_ref[...], preferred_element_type=jnp.float32) + b_qkv_ref[...]
    q = qkv[:, 0 * D:1 * D]          # already scaled by 1/sqrt(head_dim)
    k = qkv[:, 1 * D:2 * D]
    v = qkv[:, 2 * D:3 * D]

    # ---------------- head-stacked multi-head self-attention ----------------
    # q * hmask[h] contracts only over head h's columns of k, so stacking the
    # masked queries along sublanes gives all H*R per-head score rows from ONE
    # matmul; the additive bmask removes cross-batch key columns.
    hm = hmask_ref[...]                                            # (H, D)
    q_stk = jnp.concatenate(
        [q * hm[h:h + 1, :] for h in range(N_HEAD)], axis=0)       # (H*R, D)
    s = lax.dot_general(q_stk, k, (((1,), (1,)), ((), ())),
                        preferred_element_type=jnp.float32)        # (H*R, R)
    s = s + bmask_ref[...]
    # TODO(synk): an additive (L, L) attn_mask (constructor default None) would be
    #             broadcast-added to `s` here per batch/head.
    s = s - jnp.max(s, axis=-1, keepdims=True)
    e = jnp.exp(s)
    p = e * pl.reciprocal(jnp.sum(e, axis=-1, keepdims=True), approx=True)
    pv = jnp.dot(p, v, preferred_element_type=jnp.float32)          # (H*R, D)

    # select head h's output columns from its row-block and reduce over heads
    attn = pv[0:R, :] * hm[0:1, :]
    for h in range(1, N_HEAD):
        attn = attn + pv[h * R:(h + 1) * R, :] * hm[h:h + 1, :]

    attn = jnp.dot(attn, w_out_ref[...], preferred_element_type=jnp.float32) + b_out_ref[...]
    x1 = x + attn                                                   # first residual

    # ---------------- ln_2 + MLP (QuickGELU) ----------------
    yn = _layer_norm(x1, ln2_g_ref[...], ln2_b_ref[...])
    h1 = jnp.dot(yn, w_fc_ref[...], preferred_element_type=jnp.float32) + b_fc_ref[...]
    h1 = h1 * jax.nn.sigmoid(1.702 * h1)                            # QuickGELU
    y = jnp.dot(h1, w_proj_ref[...], preferred_element_type=jnp.float32) + b_proj_ref[...]

    o_ref[...] = (x1 + y).astype(o_ref.dtype)                       # second residual


def prep_params(p, seq=SEQ, batch=BATCH, d=D_MODEL):
    """One-time conversion of PyTorch-convention params to kernel-ready arrays."""
    scale = float(HEAD_DIM) ** -0.5
    # packed in_proj: rows [Wq; Wk; Wv] -> transpose to x @ W form, cols [q|k|v]
    w_qkv = p["w_in"].T                                  # (D, 3D)
    b_qkv = p["b_in"].reshape(1, 3 * d)                  # (1, 3D)
    # fold softmax scale into the q slice of the fused projection
    col_scale = jnp.concatenate(
        [jnp.full((d,), scale, jnp.float32), jnp.ones((2 * d,), jnp.float32)]
    ).reshape(1, 3 * d)
    w_qkv = w_qkv * col_scale
    b_qkv = b_qkv * col_scale

    # 0/1 head-selection column masks (H, D)
    hmask = (jnp.arange(d)[None, :] // HEAD_DIM
             == jnp.arange(N_HEAD)[:, None]).astype(jnp.float32)

    # additive batch-block mask for the head-stacked score matrix
    R = seq * batch
    qb = (jnp.arange(N_HEAD * R) % R) % batch            # batch of stacked query row
    kb = jnp.arange(R) % batch                           # batch of key row
    bmask = jnp.where(qb[:, None] == kb[None, :], 0.0, -1e30).astype(jnp.float32)

    return dict(
        ln1_g=p["ln1_g"].reshape(1, d), ln1_b=p["ln1_b"].reshape(1, d),
        w_qkv=w_qkv, b_qkv=b_qkv,
        w_out=p["w_out"].T, b_out=p["b_out"].reshape(1, d),
        ln2_g=p["ln2_g"].reshape(1, d), ln2_b=p["ln2_b"].reshape(1, d),
        w_fc=p["w_fc"].T, b_fc=p["b_fc"].reshape(1, 4 * d),
        w_proj=p["w_proj"].T, b_proj=p["b_proj"].reshape(1, d),
        hmask=hmask, bmask=bmask,
    )


@jax.jit
def residual_attention_block(x_lnd, kp):
    """x_lnd: (L, N, D) float32, PyTorch MHA layout. Returns (L, N, D)."""
    L, N, D = x_lnd.shape
    x2 = x_lnd.reshape(L * N, D)       # row-major -> free reshape, no transpose/copy
    out2 = pl.pallas_call(
        residual_block_kernel,
        out_shape=jax.ShapeDtypeStruct((L * N, D), x_lnd.dtype),
    )(x2,
      kp["ln1_g"], kp["ln1_b"],
      kp["w_qkv"], kp["b_qkv"],
      kp["w_out"], kp["b_out"],
      kp["ln2_g"], kp["ln2_b"],
      kp["w_fc"], kp["b_fc"],
      kp["w_proj"], kp["b_proj"],
      kp["hmask"], kp["bmask"])
    return out2.reshape(L, N, D)       # free reshape back


def make_params(key, d=D_MODEL):
    ks = jax.random.split(key, 8)
    init = lambda k, shape, s=0.05: (s * jax.random.normal(k, shape)).astype(jnp.float32)
    return {
        "ln1_g": jnp.ones((d,), jnp.float32),
        "ln1_b": jnp.zeros((d,), jnp.float32),
        "w_in": init(ks[0], (3 * d, d)),       # nn.MultiheadAttention.in_proj_weight
        "b_in": init(ks[1], (3 * d,)),
        "w_out": init(ks[2], (d, d)),          # out_proj
        "b_out": init(ks[3], (d,)),
        "ln2_g": jnp.ones((d,), jnp.float32),
        "ln2_b": jnp.zeros((d,), jnp.float32),
        "w_fc": init(ks[4], (4 * d, d)),       # mlp.c_fc
        "b_fc": init(ks[5], (4 * d,)),
        "w_proj": init(ks[6], (d, 4 * d)),     # mlp.c_proj
        "b_proj": init(ks[7], (d,)),
    }


def reference_block(x_lnd, p):
    """Pure-JAX reference reproducing the PyTorch forward."""
    x = jnp.transpose(x_lnd, (1, 0, 2)).astype(jnp.float32)   # (N, L, D)
    N, L, D = x.shape

    def ln(t, g, b):
        mu = t.mean(-1, keepdims=True)
        var = ((t - mu) ** 2).mean(-1, keepdims=True)
        return (t - mu) * lax.rsqrt(var + EPS) * g + b

    xn = ln(x, p["ln1_g"], p["ln1_b"])
    qkv = xn @ p["w_in"].T + p["b_in"]
    q, k, v = jnp.split(qkv, 3, axis=-1)
    heads = lambda t: t.reshape(N, L, N_HEAD, HEAD_DIM).transpose(0, 2, 1, 3)
    qh, kh, vh = heads(q), heads(k), heads(v)
    s = jnp.einsum("bhqd,bhkd->bhqk", qh, kh) / (HEAD_DIM ** 0.5)
    pr = jax.nn.softmax(s, axis=-1)
    o = jnp.einsum("bhqk,bhkd->bhqd", pr, vh).transpose(0, 2, 1, 3).reshape(N, L, D)
    x1 = x + (o @ p["w_out"].T + p["b_out"])
    yn = ln(x1, p["ln2_g"], p["ln2_b"])
    h1 = yn @ p["w_fc"].T + p["b_fc"]
    h1 = h1 * jax.nn.sigmoid(1.702 * h1)
    y = x1 + (h1 @ p["w_proj"].T + p["b_proj"])
    return jnp.transpose(y, (1, 0, 2))


if __name__ == "__main__":
    key = jax.random.PRNGKey(0)
    kx, kp_key = jax.random.split(key)
    # (L, N, D) — seq=8, batch=2, d_model=32, n_head=4
    x = jax.random.normal(kx, (SEQ, BATCH, D_MODEL), dtype=jnp.float32)
    params = make_params(kp_key)
    kparams = prep_params(params)          # one-time weight prep (fused QKV etc.)

    out = residual_attention_block(x, kparams)
    out = jax.block_until_ready(out)

    ref = reference_block(x, params)
    assert out.shape == (SEQ, BATCH, D_MODEL)
    assert jnp.allclose(out, ref, atol=1e-4, rtol=1e-3), "mismatch vs JAX reference"
    print("KERNEL_OK")
</pallas_src>

<mosaic_0001>
module attributes {stable_mosaic.version = 11 : i64} {
  func.func @residual_block_kernel(%arg0: memref<16x32xf32, #tpu.memory_space<vmem>>, %arg1: memref<1x32xf32, #tpu.memory_space<vmem>>, %arg2: memref<1x32xf32, #tpu.memory_space<vmem>>, %arg3: memref<32x96xf32, #tpu.memory_space<vmem>>, %arg4: memref<1x96xf32, #tpu.memory_space<vmem>>, %arg5: memref<32x32xf32, #tpu.memory_space<vmem>>, %arg6: memref<1x32xf32, #tpu.memory_space<vmem>>, %arg7: memref<1x32xf32, #tpu.memory_space<vmem>>, %arg8: memref<1x32xf32, #tpu.memory_space<vmem>>, %arg9: memref<32x128xf32, #tpu.memory_space<vmem>>, %arg10: memref<1x128xf32, #tpu.memory_space<vmem>>, %arg11: memref<128x32xf32, #tpu.memory_space<vmem>>, %arg12: memref<1x32xf32, #tpu.memory_space<vmem>>, %arg13: memref<4x32xf32, #tpu.memory_space<vmem>>, %arg14: memref<64x16xf32, #tpu.memory_space<vmem>>, %arg15: memref<16x32xf32, #tpu.memory_space<vmem>>) attributes {dimension_semantics = [], scalar_prefetch = 0 : i64, scratch_operands = 0 : i64, tpu.core_type = #tpu.core_type<tc>} {
    %c0 = arith.constant 0 : index
    %c0_0 = arith.constant 0 : index
    %0 = vector.load %arg0[%c0, %c0_0] : memref<16x32xf32, #tpu.memory_space<vmem>>, vector<16x32xf32>
    %c0_1 = arith.constant 0 : index
    %c0_2 = arith.constant 0 : index
    %1 = vector.load %arg1[%c0_1, %c0_2] : memref<1x32xf32, #tpu.memory_space<vmem>>, vector<1x32xf32>
    %c0_3 = arith.constant 0 : index
    %c0_4 = arith.constant 0 : index
    %2 = vector.load %arg2[%c0_3, %c0_4] : memref<1x32xf32, #tpu.memory_space<vmem>>, vector<1x32xf32>
    %cst = arith.constant dense<0.000000e+00> : vector<16xf32>
    %3 = vector.multi_reduction <add>, %0, %cst [1] : vector<16x32xf32> to vector<16xf32>
    %4 = vector.shape_cast %3 : vector<16xf32> to vector<16x1xf32>
    %cst_5 = arith.constant 3.200000e+01 : f32
    %5 = vector.broadcast %cst_5 : f32 to vector<16x1xf32>
    %6 = arith.divf %4, %5 : vector<16x1xf32>
    %7 = vector.broadcast %6 : vector<16x1xf32> to vector<16x32xf32>
    %8 = arith.subf %0, %7 : vector<16x32xf32>
    %9 = arith.mulf %8, %8 : vector<16x32xf32>
    %cst_6 = arith.constant dense<0.000000e+00> : vector<16xf32>
    %10 = vector.multi_reduction <add>, %9, %cst_6 [1] : vector<16x32xf32> to vector<16xf32>
    %11 = vector.shape_cast %10 : vector<16xf32> to vector<16x1xf32>
    %cst_7 = arith.constant 3.200000e+01 : f32
    %12 = vector.broadcast %cst_7 : f32 to vector<16x1xf32>
    %13 = arith.divf %11, %12 : vector<16x1xf32>
    %14 = vector.broadcast %6 : vector<16x1xf32> to vector<16x32xf32>
    %15 = arith.subf %0, %14 : vector<16x32xf32>
    %cst_8 = arith.constant 9.99999974E-6 : f32
    %16 = vector.broadcast %cst_8 : f32 to vector<16x1xf32>
    %17 = arith.addf %13, %16 : vector<16x1xf32>
    %18 = math.rsqrt %17 : vector<16x1xf32>
    %19 = vector.broadcast %18 : vector<16x1xf32> to vector<16x32xf32>
    %20 = arith.mulf %15, %19 : vector<16x32xf32>
    %21 = vector.broadcast %1 : vector<1x32xf32> to vector<16x32xf32>
    %22 = arith.mulf %20, %21 : vector<16x32xf32>
    %23 = vector.broadcast %2 : vector<1x32xf32> to vector<16x32xf32>
    %24 = arith.addf %22, %23 : vector<16x32xf32>
    %c0_9 = arith.constant 0 : index
    %c0_10 = arith.constant 0 : index
    %25 = vector.load %arg3[%c0_9, %c0_10] : memref<32x96xf32, #tpu.memory_space<vmem>>, vector<32x96xf32>
    %cst_11 = arith.constant dense<0.000000e+00> : vector<16x96xf32>
    %26 = tpu.matmul %24, %25, %cst_11 {dimension_numbers = #tpu.dot_dimension_numbers<[1], [0], [0], [1], [0, 0, 1, 1], [], []>} : vector<16x32xf32>, vector<32x96xf32>, vector<16x96xf32> -> vector<16x96xf32>
    %c0_12 = arith.constant 0 : index
    %c0_13 = arith.constant 0 : index
    %27 = vector.load %arg4[%c0_12, %c0_13] : memref<1x96xf32, #tpu.memory_space<vmem>>, vector<1x96xf32>
    %28 = vector.broadcast %27 : vector<1x96xf32> to vector<16x96xf32>
    %29 = arith.addf %26, %28 : vector<16x96xf32>
    %30 = vector.extract_strided_slice %29 {offsets = [0, 0], sizes = [16, 32], strides = [1, 1]} : vector<16x96xf32> to vector<16x32xf32>
    %31 = vector.extract_strided_slice %29 {offsets = [0, 32], sizes = [16, 32], strides = [1, 1]} : vector<16x96xf32> to vector<16x32xf32>
    %32 = vector.extract_strided_slice %29 {offsets = [0, 64], sizes = [16, 32], strides = [1, 1]} : vector<16x96xf32> to vector<16x32xf32>
    %c0_14 = arith.constant 0 : index
    %c0_15 = arith.constant 0 : index
    %33 = vector.load %arg13[%c0_14, %c0_15] : memref<4x32xf32, #tpu.memory_space<vmem>>, vector<4x32xf32>
    %34 = vector.extract_strided_slice %33 {offsets = [0, 0], sizes = [1, 32], strides = [1, 1]} : vector<4x32xf32> to vector<1x32xf32>
    %35 = vector.broadcast %34 : vector<1x32xf32> to vector<16x32xf32>
    %36 = arith.mulf %30, %35 : vector<16x32xf32>
    %37 = vector.extract_strided_slice %33 {offsets = [1, 0], sizes = [1, 32], strides = [1, 1]} : vector<4x32xf32> to vector<1x32xf32>
    %38 = vector.broadcast %37 : vector<1x32xf32> to vector<16x32xf32>
    %39 = arith.mulf %30, %38 : vector<16x32xf32>
    %40 = vector.extract_strided_slice %33 {offsets = [2, 0], sizes = [1, 32], strides = [1, 1]} : vector<4x32xf32> to vector<1x32xf32>
    %41 = vector.broadcast %40 : vector<1x32xf32> to vector<16x32xf32>
    %42 = arith.mulf %30, %41 : vector<16x32xf32>
    %43 = vector.extract_strided_slice %33 {offsets = [3, 0], sizes = [1, 32], strides = [1, 1]} : vector<4x32xf32> to vector<1x32xf32>
    %44 = vector.broadcast %43 : vector<1x32xf32> to vector<16x32xf32>
    %45 = arith.mulf %30, %44 : vector<16x32xf32>
    %46 = tpu.concatenate %36, %39, %42, %45 in 0 : vector<16x32xf32>, vector<16x32xf32>, vector<16x32xf32>, vector<16x32xf32> -> vector<64x32xf32>
    %cst_16 = arith.constant dense<0.000000e+00> : vector<64x16xf32>
    %47 = tpu.matmul %46, %31, %cst_16 {dimension_numbers = #tpu.dot_dimension_numbers<[1], [1], [0], [0], [0, 0, 1, 0], [], []>} : vector<64x32xf32>, vector<16x32xf32>, vector<64x16xf32> -> vector<64x16xf32>
    %c0_17 = arith.constant 0 : index
    %c0_18 = arith.constant 0 : index
    %48 = vector.load %arg14[%c0_17, %c0_18] : memref<64x16xf32, #tpu.memory_space<vmem>>, vector<64x16xf32>
    %49 = arith.addf %47, %48 : vector<64x16xf32>
    %cst_19 = arith.constant dense<0xFF800000> : vector<64xf32>
    %50 = vector.multi_reduction <maximumf>, %49, %cst_19 [1] : vector<64x16xf32> to vector<64xf32>
    %51 = vector.shape_cast %50 : vector<64xf32> to vector<64x1xf32>
    %52 = vector.broadcast %51 : vector<64x1xf32> to vector<64x16xf32>
    %53 = arith.subf %49, %52 : vector<64x16xf32>
    %54 = math.exp %53 : vector<64x16xf32>
    %cst_20 = arith.constant dense<0.000000e+00> : vector<64xf32>
    %55 = vector.multi_reduction <add>, %54, %cst_20 [1] : vector<64x16xf32> to vector<64xf32>
    %56 = vector.shape_cast %55 : vector<64xf32> to vector<64x1xf32>
    %57 = tpu.reciprocal %56 {approx = true} : vector<64x1xf32> -> vector<64x1xf32>
    %58 = vector.broadcast %57 : vector<64x1xf32> to vector<64x16xf32>
    %59 = arith.mulf %54, %58 : vector<64x16xf32>
    %cst_21 = arith.constant dense<0.000000e+00> : vector<64x32xf32>
    %60 = tpu.matmul %59, %32, %cst_21 {dimension_numbers = #tpu.dot_dimension_numbers<[1], [0], [0], [1], [0, 0, 1, 1], [], []>} : vector<64x16xf32>, vector<16x32xf32>, vector<64x32xf32> -> vector<64x32xf32>
    %61 = vector.extract_strided_slice %60 {offsets = [0, 0], sizes = [16, 32], strides = [1, 1]} : vector<64x32xf32> to vector<16x32xf32>
    %62 = vector.extract_strided_slice %33 {offsets = [0, 0], sizes = [1, 32], strides = [1, 1]} : vector<4x32xf32> to vector<1x32xf32>
    %63 = vector.broadcast %62 : vector<1x32xf32> to vector<16x32xf32>
    %64 = arith.mulf %61, %63 : vector<16x32xf32>
    %65 = vector.extract_strided_slice %60 {offsets = [16, 0], sizes = [16, 32], strides = [1, 1]} : vector<64x32xf32> to vector<16x32xf32>
    %66 = vector.extract_strided_slice %33 {offsets = [1, 0], sizes = [1, 32], strides = [1, 1]} : vector<4x32xf32> to vector<1x32xf32>
    %67 = vector.broadcast %66 : vector<1x32xf32> to vector<16x32xf32>
    %68 = arith.mulf %65, %67 : vector<16x32xf32>
    %69 = arith.addf %64, %68 : vector<16x32xf32>
    %70 = vector.extract_strided_slice %60 {offsets = [32, 0], sizes = [16, 32], strides = [1, 1]} : vector<64x32xf32> to vector<16x32xf32>
    %71 = vector.extract_strided_slice %33 {offsets = [2, 0], sizes = [1, 32], strides = [1, 1]} : vector<4x32xf32> to vector<1x32xf32>
    %72 = vector.broadcast %71 : vector<1x32xf32> to vector<16x32xf32>
    %73 = arith.mulf %70, %72 : vector<16x32xf32>
    %74 = arith.addf %69, %73 : vector<16x32xf32>
    %75 = vector.extract_strided_slice %60 {offsets = [48, 0], sizes = [16, 32], strides = [1, 1]} : vector<64x32xf32> to vector<16x32xf32>
    %76 = vector.extract_strided_slice %33 {offsets = [3, 0], sizes = [1, 32], strides = [1, 1]} : vector<4x32xf32> to vector<1x32xf32>
    %77 = vector.broadcast %76 : vector<1x32xf32> to vector<16x32xf32>
    %78 = arith.mulf %75, %77 : vector<16x32xf32>
    %79 = arith.addf %74, %78 : vector<16x32xf32>
    %c0_22 = arith.constant 0 : index
    %c0_23 = arith.constant 0 : index
    %80 = vector.load %arg5[%c0_22, %c0_23] : memref<32x32xf32, #tpu.memory_space<vmem>>, vector<32x32xf32>
    %cst_24 = arith.constant dense<0.000000e+00> : vector<16x32xf32>
    %81 = tpu.matmul %79, %80, %cst_24 {dimension_numbers = #tpu.dot_dimension_numbers<[1], [0], [0], [1], [0, 0, 1, 1], [], []>} : vector<16x32xf32>, vector<32x32xf32>, vector<16x32xf32> -> vector<16x32xf32>
    %c0_25 = arith.constant 0 : index
    %c0_26 = arith.constant 0 : index
    %82 = vector.load %arg6[%c0_25, %c0_26] : memref<1x32xf32, #tpu.memory_space<vmem>>, vector<1x32xf32>
    %83 = vector.broadcast %82 : vector<1x32xf32> to vector<16x32xf32>
    %84 = arith.addf %81, %83 : vector<16x32xf32>
    %85 = arith.addf %0, %84 : vector<16x32xf32>
    %c0_27 = arith.constant 0 : index
    %c0_28 = arith.constant 0 : index
    %86 = vector.load %arg7[%c0_27, %c0_28] : memref<1x32xf32, #tpu.memory_space<vmem>>, vector<1x32xf32>
    %c0_29 = arith.constant 0 : index
    %c0_30 = arith.constant 0 : index
    %87 = vector.load %arg8[%c0_29, %c0_30] : memref<1x32xf32, #tpu.memory_space<vmem>>, vector<1x32xf32>
    %cst_31 = arith.constant dense<0.000000e+00> : vector<16xf32>
    %88 = vector.multi_reduction <add>, %85, %cst_31 [1] : vector<16x32xf32> to vector<16xf32>
    %89 = vector.shape_cast %88 : vector<16xf32> to vector<16x1xf32>
    %cst_32 = arith.constant 3.200000e+01 : f32
    %90 = vector.broadcast %cst_32 : f32 to vector<16x1xf32>
    %91 = arith.divf %89, %90 : vector<16x1xf32>
    %92 = vector.broadcast %91 : vector<16x1xf32> to vector<16x32xf32>
    %93 = arith.subf %85, %92 : vector<16x32xf32>
    %94 = arith.mulf %93, %93 : vector<16x32xf32>
    %cst_33 = arith.constant dense<0.000000e+00> : vector<16xf32>
    %95 = vector.multi_reduction <add>, %94, %cst_33 [1] : vector<16x32xf32> to vector<16xf32>
    %96 = vector.shape_cast %95 : vector<16xf32> to vector<16x1xf32>
    %cst_34 = arith.constant 3.200000e+01 : f32
    %97 = vector.broadcast %cst_34 : f32 to vector<16x1xf32>
    %98 = arith.divf %96, %97 : vector<16x1xf32>
    %99 = vector.broadcast %91 : vector<16x1xf32> to vector<16x32xf32>
    %100 = arith.subf %85, %99 : vector<16x32xf32>
    %cst_35 = arith.constant 9.99999974E-6 : f32
    %101 = vector.broadcast %cst_35 : f32 to vector<16x1xf32>
    %102 = arith.addf %98, %101 : vector<16x1xf32>
    %103 = math.rsqrt %102 : vector<16x1xf32>
    %104 = vector.broadcast %103 : vector<16x1xf32> to vector<16x32xf32>
    %105 = arith.mulf %100, %104 : vector<16x32xf32>
    %106 = vector.broadcast %86 : vector<1x32xf32> to vector<16x32xf32>
    %107 = arith.mulf %105, %106 : vector<16x32xf32>
    %108 = vector.broadcast %87 : vector<1x32xf32> to vector<16x32xf32>
    %109 = arith.addf %107, %108 : vector<16x32xf32>
    %c0_36 = arith.constant 0 : index
    %c0_37 = arith.constant 0 : index
    %110 = vector.load %arg9[%c0_36, %c0_37] : memref<32x128xf32, #tpu.memory_space<vmem>>, vector<32x128xf32>
    %cst_38 = arith.constant dense<0.000000e+00> : vector<16x128xf32>
    %111 = tpu.matmul %109, %110, %cst_38 {dimension_numbers = #tpu.dot_dimension_numbers<[1], [0], [0], [1], [0, 0, 1, 1], [], []>} : vector<16x32xf32>, vector<32x128xf32>, vector<16x128xf32> -> vector<16x128xf32>
    %c0_39 = arith.constant 0 : index
    %c0_40 = arith.constant 0 : index
    %112 = vector.load %arg10[%c0_39, %c0_40] : memref<1x128xf32, #tpu.memory_space<vmem>>, vector<1x128xf32>
    %113 = vector.broadcast %112 : vector<1x128xf32> to vector<16x128xf32>
    %114 = arith.addf %111, %113 : vector<16x128xf32>
    %cst_41 = arith.constant 1.702000e+00 : f32
    %115 = vector.broadcast %cst_41 : f32 to vector<16x128xf32>
    %116 = arith.mulf %115, %114 : vector<16x128xf32>
    %117 = arith.negf %116 : vector<16x128xf32>
    %118 = math.exp %117 : vector<16x128xf32>
    %cst_42 = arith.constant 1.000000e+00 : f32
    %119 = vector.broadcast %cst_42 : f32 to vector<16x128xf32>
    %120 = arith.addf %119, %118 : vector<16x128xf32>
    %121 = arith.divf %119, %120 : vector<16x128xf32>
    %122 = arith.mulf %114, %121 : vector<16x128xf32>
    %c0_43 = arith.constant 0 : index
    %c0_44 = arith.constant 0 : index
    %123 = vector.load %arg11[%c0_43, %c0_44] : memref<128x32xf32, #tpu.memory_space<vmem>>, vector<128x32xf32>
    %cst_45 = arith.constant dense<0.000000e+00> : vector<16x32xf32>
    %124 = tpu.matmul %122, %123, %cst_45 {dimension_numbers = #tpu.dot_dimension_numbers<[1], [0], [0], [1], [0, 0, 1, 1], [], []>} : vector<16x128xf32>, vector<128x32xf32>, vector<16x32xf32> -> vector<16x32xf32>
    %c0_46 = arith.constant 0 : index
    %c0_47 = arith.constant 0 : index
    %125 = vector.load %arg12[%c0_46, %c0_47] : memref<1x32xf32, #tpu.memory_space<vmem>>, vector<1x32xf32>
    %126 = vector.broadcast %125 : vector<1x32xf32> to vector<16x32xf32>
    %127 = arith.addf %124, %126 : vector<16x32xf32>
    %128 = arith.addf %85, %127 : vector<16x32xf32>
    %c0_48 = arith.constant 0 : index
    %c0_49 = arith.constant 0 : index
    %129 = vector.load %arg15[%c0_48, %c0_49] : memref<16x32xf32, #tpu.memory_space<vmem>>, vector<16x32xf32>
    tpu.vector_store %arg15[%c0_48, %c0_49], %128 {strides = array<i32>} : memref<16x32xf32, #tpu.memory_space<vmem>>, vector<16x32xf32>,
    return
  }
}

</mosaic_0001>

<llo_original>
// kernel: residual_attention_block.1
$region0: #{residual_attention_block.1}
  #allocation0 [shape = 'u32[]', space=smem, size = 0x4, offset = 0x4, fixed_abs, tag = 'smem constant byte address 0x4 - core index']
  #allocation1 [shape = 'u32[144,128]{1,0:T(1,128)}', space=vmem, size = 0x12000, scoped, tag = 'internal scratch']
  %s0 = inlined_call_operand.vmem [shape: f32[16,32], index: 0, kind: input, shape index: {}]
  %s1 = inlined_call_operand.vmem [shape: f32[1,32], index: 1, kind: input, shape index: {}]
  %s2 = inlined_call_operand.vmem [shape: f32[1,32], index: 2, kind: input, shape index: {}]
  %s3 = inlined_call_operand.vmem [shape: f32[32,96], index: 3, kind: input, shape index: {}]
  %s4 = inlined_call_operand.vmem [shape: f32[1,96], index: 4, kind: input, shape index: {}]
  %s5 = inlined_call_operand.vmem [shape: f32[32,32], index: 5, kind: input, shape index: {}]
  %s6 = inlined_call_operand.vmem [shape: f32[1,32], index: 6, kind: input, shape index: {}]
  %s7 = inlined_call_operand.vmem [shape: f32[1,32], index: 7, kind: input, shape index: {}]
  %s8 = inlined_call_operand.vmem [shape: f32[1,32], index: 8, kind: input, shape index: {}]
  %s9 = inlined_call_operand.vmem [shape: f32[32,128], index: 9, kind: input, shape index: {}]
  %s10 = inlined_call_operand.vmem [shape: f32[1,128], index: 10, kind: input, shape index: {}]
  %s11 = inlined_call_operand.vmem [shape: f32[128,32], index: 11, kind: input, shape index: {}]
  %s12 = inlined_call_operand.vmem [shape: f32[1,32], index: 12, kind: input, shape index: {}]
  %s13 = inlined_call_operand.vmem [shape: f32[4,32], index: 13, kind: input, shape index: {}]
  %s14 = inlined_call_operand.vmem [shape: f32[64,16], index: 14, kind: input, shape index: {}]
  %s15 = inlined_call_operand.hbm [shape: f32[16,32], index: 15, kind: output, shape index: {}]
  %s16 = sld [smem:[#allocation0]]
  $region70: #{residual_attention_block.1} parent=0
    _
  %s18 = ssub.s32 1, %s16
  %s19 = scalar_select 0, %s18, %s16
  $region1: #{residual_attention_block.1} parent=0
    #allocation2 [shape = 'u8[8192]{0}', space=vmem, size = 0x2000, scoped, tag = 'output window, operand 0, single buffered']
    #allocation3 [shape = 's32[1]{0}', space=sflag, size = 0x4, scoped, tag = 'scoped memory for residual_attention_block.1']
    %20 = vsyncpa [#allocation3], 0
    // Predicated region
    $region2: #{residual_attention_block.1} parent=1 // pred_check
      _
    $region3: #{residual_attention_block.1} parent=1 // pred_check_branch
      %22 = sbr.rel (0) target = $region5
    $region4: #{residual_attention_block.1} parent=1 // pred_region
      _
    $region5: #{residual_attention_block.1} parent=1 // pred_fallthru
      _
    // Predicated region
    $region6: #{residual_attention_block.1} parent=1 // pred_check
      _
    $region7: #{residual_attention_block.1} parent=1 // pred_check_branch
      %24 = sbr.rel (0) target = $region9
    $region8: #{residual_attention_block.1} parent=1 // pred_region
      _
    $region9: #{residual_attention_block.1} parent=1 // pred_fallthru
      _
    // Predicated region
    $region10: #{residual_attention_block.1} parent=1 // pred_check
      _
    $region11: #{residual_attention_block.1} parent=1 // pred_check_branch
      %26 = sbr.rel (0) target = $region13
    $region12: #{residual_attention_block.1} parent=1 // pred_region
      _
    $region13: #{residual_attention_block.1} parent=1 // pred_fallthru
      _
    // Predicated region
    $region14: #{residual_attention_block.1} parent=1 // pred_check
      _
    $region15: #{residual_attention_block.1} parent=1 // pred_check_branch
      %28 = sbr.rel (0) target = $region17
    $region16: #{residual_attention_block.1} parent=1 // pred_region
      _
    $region17: #{residual_attention_block.1} parent=1 // pred_fallthru
      _
    // Predicated region
    $region18: #{residual_attention_block.1} parent=1 // pred_check
      _
    $region19: #{residual_attention_block.1} parent=1 // pred_check_branch
      %30 = sbr.rel (0) target = $region21
    $region20: #{residual_attention_block.1} parent=1 // pred_region
      _
    $region21: #{residual_attention_block.1} parent=1 // pred_fallthru
      _
    // Predicated region
    $region22: #{residual_attention_block.1} parent=1 // pred_check
      _
    $region23: #{residual_attention_block.1} parent=1 // pred_check_branch
      %32 = sbr.rel (0) target = $region25
    $region24: #{residual_attention_block.1} parent=1 // pred_region
      _
    $region25: #{residual_attention_block.1} parent=1 // pred_fallthru
      _
    // Predicated region
    $region26: #{residual_attention_block.1} parent=1 // pred_check
      _
    $region27: #{residual_attention_block.1} parent=1 // pred_check_branch
      %34 = sbr.rel (0) target = $region29
    $region28: #{residual_attention_block.1} parent=1 // pred_region
      _
    $region29: #{residual_attention_block.1} parent=1 // pred_fallthru
      _
    // Predicated region
    $region30: #{residual_attention_block.1} parent=1 // pred_check
      _
    $region31: #{residual_attention_block.1} parent=1 // pred_check_branch
      %36 = sbr.rel (0) target = $region33
    $region32: #{residual_attention_block.1} parent=1 // pred_region
      _
    $region33: #{residual_attention_block.1} parent=1 // pred_fallthru
      _
    // Predicated region
    $region34: #{residual_attention_block.1} parent=1 // pred_check
      _
    $region35: #{residual_attention_block.1} parent=1 // pred_check_branch
      %38 = sbr.rel (0) target = $region37
    $region36: #{residual_attention_block.1} parent=1 // pred_region
      _
    $region37: #{residual_attention_block.1} parent=1 // pred_fallthru
      _
    // Predicated region
    $region38: #{residual_attention_block.1} parent=1 // pred_check
      _
    $region39: #{residual_attention_block.1} parent=1 // pred_check_branch
      %40 = sbr.rel (0) target = $region41
    $region40: #{residual_attention_block.1} parent=1 // pred_region
      _
    $region41: #{residual_attention_block.1} parent=1 // pred_fallthru
      _
    // Predicated region
    $region42: #{residual_attention_block.1} parent=1 // pred_check
      _
    $region43: #{residual_attention_block.1} parent=1 // pred_check_branch
      %42 = sbr.rel (0) target = $region45
    $region44: #{residual_attention_block.1} parent=1 // pred_region
      _
    $region45: #{residual_attention_block.1} parent=1 // pred_fallthru
      _
    // Predicated region
    $region46: #{residual_attention_block.1} parent=1 // pred_check
      _
    $region47: #{residual_attention_block.1} parent=1 // pred_check_branch
      %44 = sbr.rel (0) target = $region49
    $region48: #{residual_attention_block.1} parent=1 // pred_region
      _
    $region49: #{residual_attention_block.1} parent=1 // pred_fallthru
      _
    // Predicated region
    $region50: #{residual_attention_block.1} parent=1 // pred_check
      _
    $region51: #{residual_attention_block.1} parent=1 // pred_check_branch
      %46 = sbr.rel (0) target = $region53
    $region52: #{residual_attention_block.1} parent=1 // pred_region
      _
    $region53: #{residual_attention_block.1} parent=1 // pred_fallthru
      _
    // Predicated region
    $region54: #{residual_attention_block.1} parent=1 // pred_check
      _
    $region55: #{residual_attention_block.1} parent=1 // pred_check_branch
      %48 = sbr.rel (0) target = $region57
    $region56: #{residual_attention_block.1} parent=1 // pred_region
      _
    $region57: #{residual_attention_block.1} parent=1 // pred_fallthru
      _
    // Predicated region
    $region58: #{residual_attention_block.1} parent=1 // pred_check
      _
    $region59: #{residual_attention_block.1} parent=1 // pred_check_branch
      %50 = sbr.rel (0) target = $region61
    $region60: #{residual_attention_block.1} parent=1 // pred_region
      _
    $region61: #{residual_attention_block.1} parent=1 // pred_fallthru
      _
    %v51 = vld [vmem:[%s0] sm:$0xff]
    %v52 = vld [vmem:[%s0 + $0x8] sm:$0xff]
    %v53 = vld [vmem:[%s1] sm:$0x1]
    %v54 = vld [vmem:[%s2] sm:$0x1]
    %vm55 = vcmask 261120
    %v56 = vsel %vm55, %v51, 0.0
    %57 = vadd.xlane.f32.xlu0 %v56
    %v58 = vpop.xlane.xlu0 %57
    %v59 = vsel %vm55, %v52, 0.0
    %60 = vadd.xlane.f32.xlu0 %v59
    %v61 = vpop.xlane.xlu0 %60
    %v62 = vrcp.pop 32.0
    %v63 = vmul.f32 %v58, %v62
    %v64 = vmul.f32 %v61, %v62
    %v65 = vsub.f32 %v51, %v63
    %v66 = vsub.f32 %v52, %v64
    %v67 = vmul.f32 %v65, %v65
    %v68 = vmul.f32 %v66, %v66
    %v69 = vsel %vm55, %v67, 0.0
    %70 = vadd.xlane.f32.xlu0 %v69
    %v71 = vpop.xlane.xlu0 %70
    %v72 = vsel %vm55, %v68, 0.0
    %73 = vadd.xlane.f32.xlu0 %v72
    %v74 = vpop.xlane.xlu0 %73
    %v75 = vmul.f32 %v71, %v62
    %v76 = vmul.f32 %v74, %v62
    %v77 = vadd.f32 %v75, 1e-05
    %v78 = vadd.f32 %v76, 1e-05
    %v79 = vrsqrt.pop %v77
    %v80 = vrsqrt.pop %v78
    %v81 = vmul.f32 %v65, %v79
    %v82 = vmul.f32 %v66, %v80
    %v84 = vlaneseq
    %v85 = vshrl.u32 %v84, 7
    %v86 = vsub.s32 0, %v85
    %v87 = vrot.slane %v53, %v86
    %v89 = vmul.f32 %v81, %v87
    %v90 = vmul.f32 %v82, %v87
    %v92 = vlaneseq
    %v93 = vshrl.u32 %v92, 7
    %v94 = vsub.s32 0, %v93
    %v95 = vrot.slane %v54, %v94
    %v97 = vadd.f32 %v89, %v95
    %v98 = vadd.f32 %v90, %v95
    %v99 = vld [vmem:[%s3] sm:$0xff]
    %v100 = vld [vmem:[%s3 + $0x8] sm:$0xff]
    %v101 = vld [vmem:[%s3 + $0x10] sm:$0xff]
    %v102 = vld [vmem:[%s3 + $0x18] sm:$0xff]
    %v103 = vld [vmem:[%s4] sm:$0x1]
    %v105 = vlaneseq
    %v106 = vshrl.u32 %v105, 7
    %v107 = vsub.s32 0, %v106
    %v108 = vrot.slane %v103, %v107
    %v111 = vsel %vm55, %v97, 0
    %v114 = vsel %vm55, %v98, 0
    %116 = vmatprep.subr.mxu0 0.0
    %117 = vmatpush1.msra.mxu0 %v99
    %118 = vmatprep.subr.mxu0 0.0
    %119 = vmatpush1.msra.mxu0 %v100
    %120 = vmatprep.subr.mxu0 0.0
    %121 = vmatpush1.msra.mxu0 %v101
    %122 = vmatprep.subr.mxu0 0.0
    %123 = vmatpush1.msra.mxu0 %v102
    %124 = vmatprep.subr.mxu0 0.0
    %125 = vmatpush1.msra.mxu0 0.0
    %126 = vmatprep.subr.mxu0 0.0
    %127 = vmatpush1.msra.mxu0 0.0
    %128 = vmatprep.subr.mxu0 0.0
    %129 = vmatpush1.msra.mxu0 0.0
    %130 = vmatprep.subr.mxu0 0.0
    %131 = vmatpush1.msra.mxu0 0.0
    %132 = vmatprep.subr.mxu0 0.0
    %133 = vmatpush1.msra.mxu0 0.0
    %134 = vmatprep.subr.mxu0 0.0
    %135 = vmatpush1.msra.mxu0 0.0
    %136 = vmatprep.subr.mxu0 0.0
    %137 = vmatpush1.msra.mxu0 0.0
    %138 = vmatprep.subr.mxu0 0.0
    %139 = vmatpush1.msra.mxu0 0.0
    %140 = vmatprep.subr.mxu0 0.0
    %141 = vmatpush1.msra.mxu0 0.0
    %142 = vmatprep.subr.mxu0 0.0
    %143 = vmatpush1.msra.mxu0 0.0
    %144 = vmatprep.subr.mxu0 0.0
    %145 = vmatpush1.msra.mxu0 0.0
    %146 = vmatprep.subr.mxu0 0.0
    %147 = vmatpush1.msra.mxu0 0.0
    %148 = vmatprep.subr.mxu0 0.0
    %149 = vmatpush1.msra.mxu0 0.0
    %150 = vmatprep.subr.mxu0 0.0
    %151 = vmatpush1.msra.mxu0 0.0
    %152 = vmatprep.subr.mxu0 0.0
    %153 = vmatpush1.msra.mxu0 0.0
    %154 = vmatprep.subr.mxu0 0.0
    %155 = vmatpush1.msra.mxu0 0.0
    %156 = vmatprep.subr.mxu0 0.0
    %157 = vmatpush1.msra.mxu0 0.0
    %158 = vmatprep.subr.mxu0 0.0
    %159 = vmatpush1.msra.mxu0 0.0
    %160 = vmatprep.subr.mxu0 0.0
    %161 = vmatpush1.msra.mxu0 0.0
    %162 = vmatprep.subr.mxu0 0.0
    %163 = vmatpush1.msra.mxu0 0.0
    %164 = vmatprep.subr.mxu0 0.0
    %165 = vmatpush1.msra.mxu0 0.0
    %166 = vmatprep.subr.mxu0 0.0
    %167 = vmatpush1.msra.mxu0 0.0
    %168 = vmatprep.subr.mxu0 0.0
    %169 = vmatpush1.msra.mxu0 0.0
    %170 = vmatprep.subr.mxu0 0.0
    %171 = vmatpush1.msra.mxu0 0.0
    %172 = vmatprep.subr.mxu0 0.0
    %173 = vmatpush1.msra.mxu0 0.0
    %174 = vmatprep.subr.mxu0 0.0
    %175 = vmatpush1.msra.mxu0 0.0
    %176 = vmatprep.subr.mxu0 0.0
    %177 = vmatpush1.msra.mxu0 0.0
    %178 = vmatprep.subr.mxu0 0.0
    %179 = vmatpush1.msra.mxu0 0.0
    %180 = vmatprep.mubr.f32.mxu0 0.0
    %181 = vmatmul.mubr.f32.gmra.mrb[0].mxu0 %v111
    %v182 = vpop.f32.mrb[0].mxu0
    %v183 = vadd.f32 %v108, %v182
    %v184 = vpop.f32.mrb[0].mxu0
    %185 = vmatprep.mubr.f32.mxu0 0.0
    %186 = vmatmul.mubr.f32.gmra.mrb[0].mxu0 %v114
    %v187 = vpop.f32.mrb[0].mxu0
    %v188 = vadd.f32 %v108, %v187
    %v189 = vpop.f32.mrb[0].mxu0
    %190 = vdwg.mxu0
    %v191 = vld [vmem:[%s13] sm:$0xf]
    %v192 = vlaneseq
    %v193 = vshrl.u32 %v192, 7
    %v194 = vsub.s32 0, %v193
    %v195 = vrot.slane %v191, %v194
    %v196 = vmul.f32 %v183, %v195
    %v197 = vmul.f32 %v188, %v195
    %v198 = vlaneseq
    %v199 = vshrl.u32 %v198, 7
    %v200 = vsub.s32 1, %v199
    %v201 = vrot.slane %v191, %v200
    %v202 = vmul.f32 %v183, %v201
    %v203 = vmul.f32 %v188, %v201
    %v204 = vlaneseq
    %v205 = vshrl.u32 %v204, 7
    %v206 = vsub.s32 2, %v205
    %v207 = vrot.slane %v191, %v206
    %v208 = vmul.f32 %v183, %v207
    %v209 = vmul.f32 %v188, %v207
    %v210 = vlaneseq
    %v211 = vshrl.u32 %v210, 7
    %v212 = vsub.s32 3, %v211
    %v213 = vrot.slane %v191, %v212
    %v214 = vmul.f32 %v183, %v213
    %v215 = vmul.f32 %v188, %v213
    %v216 = vld [vmem:[%s14] sm:$0xff]
    %v217 = vld [vmem:[%s14 + $0x8] sm:$0xff]
    %v218 = vld [vmem:[%s14 + $0x10] sm:$0xff]
    %v219 = vld [vmem:[%s14 + $0x18] sm:$0xff]
    %v220 = vld [vmem:[%s14 + $0x20] sm:$0xff]
    %v221 = vld [vmem:[%s14 + $0x28] sm:$0xff]
    %v222 = vld [vmem:[%s14 + $0x30] sm:$0xff]
    %v223 = vld [vmem:[%s14 + $0x38] sm:$0xff]
    %226 = vrot.lane.b32.xlu0 %v183, 96
    %v227 = vpop.permute.xlu0 %226
    %228 = vrot.lane.b32.xlu0 %v188, 96
    %v229 = vpop.permute.xlu0 %228
    %v231 = vsel %vm55, %v196, 0
    %v234 = vsel %vm55, %v197, 0
    %v237 = vsel %vm55, %v202, 0
    %v240 = vsel %vm55, %v203, 0
    %v243 = vsel %vm55, %v208, 0
    %v246 = vsel %vm55, %v209, 0
    %v249 = vsel %vm55, %v214, 0
    %v252 = vsel %vm55, %v215, 0
    %v254 = vsel %vm55, %v227, 0
    %v256 = vsel %vm55, %v229, 0
    %258 = vmatprep.subr.mxu0 0.0
    %259 = vmatpush1.xpose.msra.mxu0 %v254
    %260 = vmatprep.subr.mxu0 0.0
    %261 = vmatpush1.xpose.msra.mxu0 %v256
    %262 = vmatprep.subr.mxu0 0.0
    %263 = vmatpush1.xpose.msra.mxu0 0.0
    %264 = vmatprep.subr.mxu0 0.0
    %265 = vmatpush1.xpose.msra.mxu0 0.0
    %266 = vmatprep.subr.mxu0 0.0
    %267 = vmatpush1.xpose.msra.mxu0 0.0
    %268 = vmatprep.subr.mxu0 0.0
    %269 = vmatpush1.xpose.msra.mxu0 0.0
    %270 = vmatprep.subr.mxu0 0.0
    %271 = vmatpush1.xpose.msra.mxu0 0.0
    %272 = vmatprep.subr.mxu0 0.0
    %273 = vmatpush1.xpose.msra.mxu0 0.0
    %274 = vmatprep.subr.mxu0 0.0
    %275 = vmatpush1.xpose.msra.mxu0 0.0
    %276 = vmatprep.subr.mxu0 0.0
    %277 = vmatpush1.xpose.msra.mxu0 0.0
    %278 = vmatprep.subr.mxu0 0.0
    %279 = vmatpush1.xpose.msra.mxu0 0.0
    %280 = vmatprep.subr.mxu0 0.0
    %281 = vmatpush1.xpose.msra.mxu0 0.0
    %282 = vmatprep.subr.mxu0 0.0
    %283 = vmatpush1.xpose.msra.mxu0 0.0
    %284 = vmatprep.subr.mxu0 0.0
    %285 = vmatpush1.xpose.msra.mxu0 0.0
    %286 = vmatprep.subr.mxu0 0.0
    %287 = vmatpush1.xpose.msra.mxu0 0.0
    %288 = vmatprep.subr.mxu0 0.0
    %289 = vmatpush1.xpose.msra.mxu0 0.0
    %290 = vmatprep.subr.mxu0 0.0
    %291 = vmatpush1.xpose.msra.mxu0 0.0
    %292 = vmatprep.subr.mxu0 0.0
    %293 = vmatpush1.xpose.msra.mxu0 0.0
    %294 = vmatprep.subr.mxu0 0.0
    %295 = vmatpush1.xpose.msra.mxu0 0.0
    %296 = vmatprep.subr.mxu0 0.0
    %297 = vmatpush1.xpose.msra.mxu0 0.0
    %298 = vmatprep.subr.mxu0 0.0
    %299 = vmatpush1.xpose.msra.mxu0 0.0
    %300 = vmatprep.subr.mxu0 0.0
    %301 = vmatpush1.xpose.msra.mxu0 0.0
    %302 = vmatprep.subr.mxu0 0.0
    %303 = vmatpush1.xpose.msra.mxu0 0.0
    %304 = vmatprep.subr.mxu0 0.0
    %305 = vmatpush1.xpose.msra.mxu0 0.0
    %306 = vmatprep.subr.mxu0 0.0
    %307 = vmatpush1.xpose.msra.mxu0 0.0
    %308 = vmatprep.subr.mxu0 0.0
    %309 = vmatpush1.xpose.msra.mxu0 0.0
    %310 = vmatprep.subr.mxu0 0.0
    %311 = vmatpush1.xpose.msra.mxu0 0.0
    %312 = vmatprep.subr.mxu0 0.0
    %313 = vmatpush1.xpose.msra.mxu0 0.0
    %314 = vmatprep.subr.mxu0 0.0
    %315 = vmatpush1.xpose.msra.mxu0 0.0
    %316 = vmatprep.subr.mxu0 0.0
    %317 = vmatpush1.xpose.msra.mxu0 0.0
    %318 = vmatprep.subr.mxu0 0.0
    %319 = vmatpush1.xpose.msra.mxu0 0.0
    %320 = vmatprep.subr.mxu0 0.0
    %321 = vmatpush1.xpose.msra.mxu0 0.0
    %322 = vmatprep.mubr.f32.mxu0 0.0
    %323 = vmatmul.mubr.f32.gmra.mrb[0].mxu0 %v231
    %v324 = vpop.f32.mrb[0].mxu0
    %v325 = vadd.f32 %v216, %v324
    %v326 = vpop.f32.mrb[0].mxu0
    %327 = vmatprep.mubr.f32.mxu0 0.0
    %328 = vmatmul.mubr.f32.gmra.mrb[0].mxu0 %v234
    %v329 = vpop.f32.mrb[0].mxu0
    %v330 = vadd.f32 %v217, %v329
    %v331 = vpop.f32.mrb[0].mxu0
    %332 = vmatprep.mubr.f32.mxu0 0.0
    %333 = vmatmul.mubr.f32.gmra.mrb[0].mxu0 %v237
    %v334 = vpop.f32.mrb[0].mxu0
    %v335 = vadd.f32 %v218, %v334
    %v336 = vpop.f32.mrb[0].mxu0
    %337 = vmatprep.mubr.f32.mxu0 0.0
    %338 = vmatmul.mubr.f32.gmra.mrb[0].mxu0 %v240
    %v339 = vpop.f32.mrb[0].mxu0
    %v340 = vadd.f32 %v219, %v339
    %v341 = vpop.f32.mrb[0].mxu0
    %342 = vmatprep.mubr.f32.mxu0 0.0
    %343 = vmatmul.mubr.f32.gmra.mrb[0].mxu0 %v243
    %v344 = vpop.f32.mrb[0].mxu0
    %v345 = vadd.f32 %v220, %v344
    %v346 = vpop.f32.mrb[0].mxu0
    %347 = vmatprep.mubr.f32.mxu0 0.0
    %348 = vmatmul.mubr.f32.gmra.mrb[0].mxu0 %v246
    %v349 = vpop.f32.mrb[0].mxu0
    %v350 = vadd.f32 %v221, %v349
    %v351 = vpop.f32.mrb[0].mxu0
    %352 = vmatprep.mubr.f32.mxu0 0.0
    %353 = vmatmul.mubr.f32.gmra.mrb[0].mxu0 %v249
    %v354 = vpop.f32.mrb[0].mxu0
    %v355 = vadd.f32 %v222, %v354
    %v356 = vpop.f32.mrb[0].mxu0
    %357 = vmatprep.mubr.f32.mxu0 0.0
    %358 = vmatmul.mubr.f32.gmra.mrb[0].mxu0 %v252
    %v359 = vpop.f32.mrb[0].mxu0
    %v360 = vadd.f32 %v223, %v359
    %v361 = vpop.f32.mrb[0].mxu0
    %362 = vdwg.mxu0
    %vm363 = vcmask 130048
    %v364 = vsel %vm363, %v325, -inf
    %365 = vmax.xlane.f32.xlu0 %v364
    %v366 = vpop.xlane.xlu0 %365
    %v367 = vsel %vm363, %v330, -inf
    %368 = vmax.xlane.f32.xlu0 %v367
    %v369 = vpop.xlane.xlu0 %368
    %v370 = vsel %vm363, %v335, -inf
    %371 = vmax.xlane.f32.xlu0 %v370
    %v372 = vpop.xlane.xlu0 %371
    %v373 = vsel %vm363, %v340, -inf
    %374 = vmax.xlane.f32.xlu0 %v373
    %v375 = vpop.xlane.xlu0 %374
    %v376 = vsel %vm363, %v345, -inf
    %377 = vmax.xlane.f32.xlu0 %v376
    %v378 = vpop.xlane.xlu0 %377
    %v379 = vsel %vm363, %v350, -inf
    %380 = vmax.xlane.f32.xlu0 %v379
    %v381 = vpop.xlane.xlu0 %380
    %v382 = vsel %vm363, %v355, -inf
    %383 = vmax.xlane.f32.xlu0 %v382
    %v384 = vpop.xlane.xlu0 %383
    %v385 = vsel %vm363, %v360, -inf
    %386 = vmax.xlane.f32.xlu0 %v385
    %v387 = vpop.xlane.xlu0 %386
    %v388 = vsub.f32 %v325, %v366
    %v389 = vsub.f32 %v330, %v369
    %v390 = vsub.f32 %v335, %v372
    %v391 = vsub.f32 %v340, %v375
    %v392 = vsub.f32 %v345, %v378
    %v393 = vsub.f32 %v350, %v381
    %v394 = vsub.f32 %v355, %v384
    %v395 = vsub.f32 %v360, %v387
    %v396 = vmul.f32 %v388, 1.442695
    %v397 = vpow.pop %v396
    %v398 = vmul.f32 %v389, 1.442695
    %v399 = vpow.pop %v398
    %v400 = vmul.f32 %v390, 1.442695
    %v401 = vpow.pop %v400
    %v402 = vmul.f32 %v391, 1.442695
    %v403 = vpow.pop %v402
    %v404 = vmul.f32 %v392, 1.442695
    %v405 = vpow.pop %v404
    %v406 = vmul.f32 %v393, 1.442695
    %v407 = vpow.pop %v406
    %v408 = vmul.f32 %v394, 1.442695
    %v409 = vpow.pop %v408
    %v410 = vmul.f32 %v395, 1.442695
    %v411 = vpow.pop %v410
    %v412 = vsel %vm363, %v397, 0.0
    %413 = vadd.xlane.f32.xlu0 %v412
    %v414 = vpop.xlane.xlu0 %413
    %v415 = vsel %vm363, %v399, 0.0
    %416 = vadd.xlane.f32.xlu0 %v415
    %v417 = vpop.xlane.xlu0 %416
    %v418 = vsel %vm363, %v401, 0.0
    %419 = vadd.xlane.f32.xlu0 %v418
    %v420 = vpop.xlane.xlu0 %419
    %v421 = vsel %vm363, %v403, 0.0
    %422 = vadd.xlane.f32.xlu0 %v421
    %v423 = vpop.xlane.xlu0 %422
    %v424 = vsel %vm363, %v405, 0.0
    %425 = vadd.xlane.f32.xlu0 %v424
    %v426 = vpop.xlane.xlu0 %425
    %v427 = vsel %vm363, %v407, 0.0
    %428 = vadd.xlane.f32.xlu0 %v427
    %v429 = vpop.xlane.xlu0 %428
    %v430 = vsel %vm363, %v409, 0.0
    %431 = vadd.xlane.f32.xlu0 %v430
    %v432 = vpop.xlane.xlu0 %431
    %v433 = vsel %vm363, %v411, 0.0
    %434 = vadd.xlane.f32.xlu0 %v433
    %v435 = vpop.xlane.xlu0 %434
    %v436 = vrcp.pop %v414
    %v437 = vrcp.pop %v417
    %v438 = vrcp.pop %v420
    %v439 = vrcp.pop %v423
    %v440 = vrcp.pop %v426
    %v441 = vrcp.pop %v429
    %v442 = vrcp.pop %v432
    %v443 = vrcp.pop %v435
    %v444 = vmul.f32 %v397, %v436
    %v445 = vmul.f32 %v399, %v437
    %v446 = vmul.f32 %v401, %v438
    %v447 = vmul.f32 %v403, %v439
    %v448 = vmul.f32 %v405, %v440
    %v449 = vmul.f32 %v407, %v441
    %v450 = vmul.f32 %v409, %v442
    %v451 = vmul.f32 %v411, %v443
    %452 = vrot.lane.b32.xlu0 %v183, 64
    %v453 = vpop.permute.xlu0 %452
    %454 = vrot.lane.b32.xlu0 %v188, 64
    %v455 = vpop.permute.xlu0 %454
    %v459 = vsel %vm363, %v444, 0
    %v462 = vsel %vm363, %v445, 0
    %v465 = vsel %vm363, %v446, 0
    %v468 = vsel %vm363, %v447, 0
    %v471 = vsel %vm363, %v448, 0
    %v474 = vsel %vm363, %v449, 0
    %v477 = vsel %vm363, %v450, 0
    %v480 = vsel %vm363, %v451, 0
    %482 = vmatprep.subr.mxu0 0.0
    %483 = vmatpush1.msra.mxu0 %v453
    %484 = vmatprep.subr.mxu0 0.0
    %485 = vmatpush1.msra.mxu0 %v455
    %486 = vmatprep.subr.mxu0 0.0
    %487 = vmatpush1.msra.mxu0 0.0
    %488 = vmatprep.subr.mxu0 0.0
    %489 = vmatpush1.msra.mxu0 0.0
    %490 = vmatprep.subr.mxu0 0.0
    %491 = vmatpush1.msra.mxu0 0.0
    %492 = vmatprep.subr.mxu0 0.0
    %493 = vmatpush1.msra.mxu0 0.0
    %494 = vmatprep.subr.mxu0 0.0
    %495 = vmatpush1.msra.mxu0 0.0
    %496 = vmatprep.subr.mxu0 0.0
    %497 = vmatpush1.msra.mxu0 0.0
    %498 = vmatprep.subr.mxu0 0.0
    %499 = vmatpush1.msra.mxu0 0.0
    %500 = vmatprep.subr.mxu0 0.0
    %501 = vmatpush1.msra.mxu0 0.0
    %502 = vmatprep.subr.mxu0 0.0
    %503 = vmatpush1.msra.mxu0 0.0
    %504 = vmatprep.subr.mxu0 0.0
    %505 = vmatpush1.msra.mxu0 0.0
    %506 = vmatprep.subr.mxu0 0.0
    %507 = vmatpush1.msra.mxu0 0.0
    %508 = vmatprep.subr.mxu0 0.0
    %509 = vmatpush1.msra.mxu0 0.0
    %510 = vmatprep.subr.mxu0 0.0
    %511 = vmatpush1.msra.mxu0 0.0
    %512 = vmatprep.subr.mxu0 0.0
    %513 = vmatpush1.msra.mxu0 0.0
    %514 = vmatprep.subr.mxu0 0.0
    %515 = vmatpush1.msra.mxu0 0.0
    %516 = vmatprep.subr.mxu0 0.0
    %517 = vmatpush1.msra.mxu0 0.0
    %518 = vmatprep.subr.mxu0 0.0
    %519 = vmatpush1.msra.mxu0 0.0
    %520 = vmatprep.subr.mxu0 0.0
    %521 = vmatpush1.msra.mxu0 0.0
    %522 = vmatprep.subr.mxu0 0.0
    %523 = vmatpush1.msra.mxu0 0.0
    %524 = vmatprep.subr.mxu0 0.0
    %525 = vmatpush1.msra.mxu0 0.0
    %526 = vmatprep.subr.mxu0 0.0
    %527 = vmatpush1.msra.mxu0 0.0
    %528 = vmatprep.subr.mxu0 0.0
    %529 = vmatpush1.msra.mxu0 0.0
    %530 = vmatprep.subr.mxu0 0.0
    %531 = vmatpush1.msra.mxu0 0.0
    %532 = vmatprep.subr.mxu0 0.0
    %533 = vmatpush1.msra.mxu0 0.0
    %534 = vmatprep.subr.mxu0 0.0
    %535 = vmatpush1.msra.mxu0 0.0
    %536 = vmatprep.subr.mxu0 0.0
    %537 = vmatpush1.msra.mxu0 0.0
    %538 = vmatprep.subr.mxu0 0.0
    %539 = vmatpush1.msra.mxu0 0.0
    %540 = vmatprep.subr.mxu0 0.0
    %541 = vmatpush1.msra.mxu0 0.0
    %542 = vmatprep.subr.mxu0 0.0
    %543 = vmatpush1.msra.mxu0 0.0
    %544 = vmatprep.subr.mxu0 0.0
    %545 = vmatpush1.msra.mxu0 0.0
    %546 = vmatprep.mubr.f32.mxu0 0.0
    %547 = vmatmul.mubr.f32.gmra.mrb[0].mxu0 %v459
    %v548 = vpop.f32.mrb[0].mxu0
    %v549 = vadd.f32 0.0, %v548
    %v550 = vpop.f32.mrb[0].mxu0
    %551 = vmatprep.mubr.f32.mxu0 0.0
    %552 = vmatmul.mubr.f32.gmra.mrb[0].mxu0 %v462
    %v553 = vpop.f32.mrb[0].mxu0
    %v554 = vadd.f32 0.0, %v553
    %v555 = vpop.f32.mrb[0].mxu0
    %556 = vmatprep.mubr.f32.mxu0 0.0
    %557 = vmatmul.mubr.f32.gmra.mrb[0].mxu0 %v465
    %v558 = vpop.f32.mrb[0].mxu0
    %v559 = vadd.f32 0.0, %v558
    %v560 = vpop.f32.mrb[0].mxu0
    %561 = vmatprep.mubr.f32.mxu0 0.0
    %562 = vmatmul.mubr.f32.gmra.mrb[0].mxu0 %v468
    %v563 = vpop.f32.mrb[0].mxu0
    %v564 = vadd.f32 0.0, %v563
    %v565 = vpop.f32.mrb[0].mxu0
    %566 = vmatprep.mubr.f32.mxu0 0.0
    %567 = vmatmul.mubr.f32.gmra.mrb[0].mxu0 %v471
    %v568 = vpop.f32.mrb[0].mxu0
    %v569 = vadd.f32 0.0, %v568
    %v570 = vpop.f32.mrb[0].mxu0
    %571 = vmatprep.mubr.f32.mxu0 0.0
    %572 = vmatmul.mubr.f32.gmra.mrb[0].mxu0 %v474
    %v573 = vpop.f32.mrb[0].mxu0
    %v574 = vadd.f32 0.0, %v573
    %v575 = vpop.f32.mrb[0].mxu0
    %576 = vmatprep.mubr.f32.mxu0 0.0
    %577 = vmatmul.mubr.f32.gmra.mrb[0].mxu0 %v477
    %v578 = vpop.f32.mrb[0].mxu0
    %v579 = vadd.f32 0.0, %v578
    %v580 = vpop.f32.mrb[0].mxu0
    %581 = vmatprep.mubr.f32.mxu0 0.0
    %582 = vmatmul.mubr.f32.gmra.mrb[0].mxu0 %v480
    %v583 = vpop.f32.mrb[0].mxu0
    %v584 = vadd.f32 0.0, %v583
    %v585 = vpop.f32.mrb[0].mxu0
    %586 = vdwg.mxu0
    %v587 = vmul.f32 %v549, %v195
    %v588 = vmul.f32 %v554, %v195
    %v589 = vmul.f32 %v559, %v201
    %v590 = vmul.f32 %v564, %v201
    %v591 = vadd.f32 %v587, %v589
    %v592 = vadd.f32 %v588, %v590
    %v593 = vmul.f32 %v569, %v207
    %v594 = vmul.f32 %v574, %v207
    %v595 = vadd.f32 %v591, %v593
    %v596 = vadd.f32 %v592, %v594
    %v597 = vmul.f32 %v579, %v213
    %v598 = vmul.f32 %v584, %v213
    %v599 = vadd.f32 %v595, %v597
    %v600 = vadd.f32 %v596, %v598
    %v601 = vld [vmem:[%s5] sm:$0xff]
    %v602 = vld [vmem:[%s5 + $0x8] sm:$0xff]
    %v603 = vld [vmem:[%s5 + $0x10] sm:$0xff]
    %v604 = vld [vmem:[%s5 + $0x18] sm:$0xff]
    %v605 = vld [vmem:[%s6] sm:$0x1]
    %v607 = vlaneseq
    %v608 = vshrl.u32 %v607, 7
    %v609 = vsub.s32 0, %v608
    %v610 = vrot.slane %v605, %v609
    %v613 = vsel %vm55, %v599, 0
    %v616 = vsel %vm55, %v600, 0
    %618 = vmatprep.subr.mxu0 0.0
    %619 = vmatpush1.msra.mxu0 %v601
    %620 = vmatprep.subr.mxu0 0.0
    %621 = vmatpush1.msra.mxu0 %v602
    %622 = vmatprep.subr.mxu0 0.0
    %623 = vmatpush1.msra.mxu0 %v603
    %624 = vmatprep.subr.mxu0 0.0
    %625 = vmatpush1.msra.mxu0 %v604
    %626 = vmatprep.subr.mxu0 0.0
    %627 = vmatpush1.msra.mxu0 0.0
    %628 = vmatprep.subr.mxu0 0.0
    %629 = vmatpush1.msra.mxu0 0.0
    %630 = vmatprep.subr.mxu0 0.0
    %631 = vmatpush1.msra.mxu0 0.0
    %632 = vmatprep.subr.mxu0 0.0
    %633 = vmatpush1.msra.mxu0 0.0
    %634 = vmatprep.subr.mxu0 0.0
    %635 = vmatpush1.msra.mxu0 0.0
    %636 = vmatprep.subr.mxu0 0.0
    %637 = vmatpush1.msra.mxu0 0.0
    %638 = vmatprep.subr.mxu0 0.0
    %639 = vmatpush1.msra.mxu0 0.0
    %640 = vmatprep.subr.mxu0 0.0
    %641 = vmatpush1.msra.mxu0 0.0
    %642 = vmatprep.subr.mxu0 0.0
    %643 = vmatpush1.msra.mxu0 0.0
    %644 = vmatprep.subr.mxu0 0.0
    %645 = vmatpush1.msra.mxu0 0.0
    %646 = vmatprep.subr.mxu0 0.0
    %647 = vmatpush1.msra.mxu0 0.0
    %648 = vmatprep.subr.mxu0 0.0
    %649 = vmatpush1.msra.mxu0 0.0
    %650 = vmatprep.subr.mxu0 0.0
    %651 = vmatpush1.msra.mxu0 0.0
    %652 = vmatprep.subr.mxu0 0.0
    %653 = vmatpush1.msra.mxu0 0.0
    %654 = vmatprep.subr.mxu0 0.0
    %655 = vmatpush1.msra.mxu0 0.0
    %656 = vmatprep.subr.mxu0 0.0
    %657 = vmatpush1.msra.mxu0 0.0
    %658 = vmatprep.subr.mxu0 0.0
    %659 = vmatpush1.msra.mxu0 0.0
    %660 = vmatprep.subr.mxu0 0.0
    %661 = vmatpush1.msra.mxu0 0.0
    %662 = vmatprep.subr.mxu0 0.0
    %663 = vmatpush1.msra.mxu0 0.0
    %664 = vmatprep.subr.mxu0 0.0
    %665 = vmatpush1.msra.mxu0 0.0
    %666 = vmatprep.subr.mxu0 0.0
    %667 = vmatpush1.msra.mxu0 0.0
    %668 = vmatprep.subr.mxu0 0.0
    %669 = vmatpush1.msra.mxu0 0.0
    %670 = vmatprep.subr.mxu0 0.0
    %671 = vmatpush1.msra.mxu0 0.0
    %672 = vmatprep.subr.mxu0 0.0
    %673 = vmatpush1.msra.mxu0 0.0
    %674 = vmatprep.subr.mxu0 0.0
    %675 = vmatpush1.msra.mxu0 0.0
    %676 = vmatprep.subr.mxu0 0.0
    %677 = vmatpush1.msra.mxu0 0.0
    %678 = vmatprep.subr.mxu0 0.0
    %679 = vmatpush1.msra.mxu0 0.0
    %680 = vmatprep.subr.mxu0 0.0
    %681 = vmatpush1.msra.mxu0 0.0
    %682 = vmatprep.mubr.f32.mxu0 0.0
    %683 = vmatmul.mubr.f32.gmra.mrb[0].mxu0 %v613
    %v684 = vpop.f32.mrb[0].mxu0
    %v685 = vadd.f32 %v610, %v684
    %v686 = vpop.f32.mrb[0].mxu0
    %687 = vmatprep.mubr.f32.mxu0 0.0
    %688 = vmatmul.mubr.f32.gmra.mrb[0].mxu0 %v616
    %v689 = vpop.f32.mrb[0].mxu0
    %v690 = vadd.f32 %v610, %v689
    %v691 = vpop.f32.mrb[0].mxu0
    %692 = vdwg.mxu0
    %v693 = vadd.f32 %v51, %v685
    %v694 = vadd.f32 %v52, %v690
    %v695 = vld [vmem:[%s7] sm:$0x1]
    %v696 = vld [vmem:[%s8] sm:$0x1]
    %v697 = vsel %vm55, %v693, 0.0
    %698 = vadd.xlane.f32.xlu0 %v697
    %v699 = vpop.xlane.xlu0 %698
    %v700 = vsel %vm55, %v694, 0.0
    %701 = vadd.xlane.f32.xlu0 %v700
    %v702 = vpop.xlane.xlu0 %701
    %v703 = vmul.f32 %v699, %v62
    %v704 = vmul.f32 %v702, %v62
    %v705 = vsub.f32 %v693, %v703
    %v706 = vsub.f32 %v694, %v704
    %v707 = vmul.f32 %v705, %v705
    %v708 = vmul.f32 %v706, %v706
    %v709 = vsel %vm55, %v707, 0.0
    %710 = vadd.xlane.f32.xlu0 %v709
    %v711 = vpop.xlane.xlu0 %710
    %v712 = vsel %vm55, %v708, 0.0
    %713 = vadd.xlane.f32.xlu0 %v712
    %v714 = vpop.xlane.xlu0 %713
    %v715 = vmul.f32 %v711, %v62
    %v716 = vmul.f32 %v714, %v62
    %v717 = vadd.f32 %v715, 1e-05
    %v718 = vadd.f32 %v716, 1e-05
    %v719 = vrsqrt.pop %v717
    %v720 = vrsqrt.pop %v718
    %v721 = vmul.f32 %v705, %v719
    %v722 = vmul.f32 %v706, %v720
    %v724 = vlaneseq
    %v725 = vshrl.u32 %v724, 7
    %v726 = vsub.s32 0, %v725
    %v727 = vrot.slane %v695, %v726
    %v729 = vmul.f32 %v721, %v727
    %v730 = vmul.f32 %v722, %v727
    %v732 = vlaneseq
    %v733 = vshrl.u32 %v732, 7
    %v734 = vsub.s32 0, %v733
    %v735 = vrot.slane %v696, %v734
    %v737 = vadd.f32 %v729, %v735
    %v738 = vadd.f32 %v730, %v735
    %v739 = vld [vmem:[%s9] sm:$0xff]
    %v740 = vld [vmem:[%s9 + $0x8] sm:$0xff]
    %v741 = vld [vmem:[%s9 + $0x10] sm:$0xff]
    %v742 = vld [vmem:[%s9 + $0x18] sm:$0xff]
    %v743 = vld [vmem:[%s10] sm:$0x1]
    %v745 = vlaneseq
    %v746 = vshrl.u32 %v745, 7
    %v747 = vsub.s32 0, %v746
    %v748 = vrot.slane %v743, %v747
    %v751 = vsel %vm55, %v737, 0
    %v754 = vsel %vm55, %v738, 0
    %756 = vmatprep.subr.mxu0 0.0
    %757 = vmatpush1.msra.mxu0 %v739
    %758 = vmatprep.subr.mxu0 0.0
    %759 = vmatpush1.msra.mxu0 %v740
    %760 = vmatprep.subr.mxu0 0.0
    %761 = vmatpush1.msra.mxu0 %v741
    %762 = vmatprep.subr.mxu0 0.0
    %763 = vmatpush1.msra.mxu0 %v742
    %764 = vmatprep.subr.mxu0 0.0
    %765 = vmatpush1.msra.mxu0 0.0
    %766 = vmatprep.subr.mxu0 0.0
    %767 = vmatpush1.msra.mxu0 0.0
    %768 = vmatprep.subr.mxu0 0.0
    %769 = vmatpush1.msra.mxu0 0.0
    %770 = vmatprep.subr.mxu0 0.0
    %771 = vmatpush1.msra.mxu0 0.0
    %772 = vmatprep.subr.mxu0 0.0
    %773 = vmatpush1.msra.mxu0 0.0
    %774 = vmatprep.subr.mxu0 0.0
    %775 = vmatpush1.msra.mxu0 0.0
    %776 = vmatprep.subr.mxu0 0.0
    %777 = vmatpush1.msra.mxu0 0.0
    %778 = vmatprep.subr.mxu0 0.0
    %779 = vmatpush1.msra.mxu0 0.0
    %780 = vmatprep.subr.mxu0 0.0
    %781 = vmatpush1.msra.mxu0 0.0
    %782 = vmatprep.subr.mxu0 0.0
    %783 = vmatpush1.msra.mxu0 0.0
    %784 = vmatprep.subr.mxu0 0.0
    %785 = vmatpush1.msra.mxu0 0.0
    %786 = vmatprep.subr.mxu0 0.0
    %787 = vmatpush1.msra.mxu0 0.0
    %788 = vmatprep.subr.mxu0 0.0
    %789 = vmatpush1.msra.mxu0 0.0
    %790 = vmatprep.subr.mxu0 0.0
    %791 = vmatpush1.msra.mxu0 0.0
    %792 = vmatprep.subr.mxu0 0.0
    %793 = vmatpush1.msra.mxu0 0.0
    %794 = vmatprep.subr.mxu0 0.0
    %795 = vmatpush1.msra.mxu0 0.0
    %796 = vmatprep.subr.mxu0 0.0
    %797 = vmatpush1.msra.mxu0 0.0
    %798 = vmatprep.subr.mxu0 0.0
    %799 = vmatpush1.msra.mxu0 0.0
    %800 = vmatprep.subr.mxu0 0.0
    %801 = vmatpush1.msra.mxu0 0.0
    %802 = vmatprep.subr.mxu0 0.0
    %803 = vmatpush1.msra.mxu0 0.0
    %804 = vmatprep.subr.mxu0 0.0
    %805 = vmatpush1.msra.mxu0 0.0
    %806 = vmatprep.subr.mxu0 0.0
    %807 = vmatpush1.msra.mxu0 0.0
    %808 = vmatprep.subr.mxu0 0.0
    %809 = vmatpush1.msra.mxu0 0.0
    %810 = vmatprep.subr.mxu0 0.0
    %811 = vmatpush1.msra.mxu0 0.0
    %812 = vmatprep.subr.mxu0 0.0
    %813 = vmatpush1.msra.mxu0 0.0
    %814 = vmatprep.subr.mxu0 0.0
    %815 = vmatpush1.msra.mxu0 0.0
    %816 = vmatprep.subr.mxu0 0.0
    %817 = vmatpush1.msra.mxu0 0.0
    %818 = vmatprep.subr.mxu0 0.0
    %819 = vmatpush1.msra.mxu0 0.0
    %820 = vmatprep.mubr.f32.mxu0 0.0
    %821 = vmatmul.mubr.f32.gmra.mrb[0].mxu0 %v751
    %v822 = vpop.f32.mrb[0].mxu0
    %v823 = vadd.f32 %v748, %v822
    %v824 = vpop.f32.mrb[0].mxu0
    %825 = vmatprep.mubr.f32.mxu0 0.0
    %826 = vmatmul.mubr.f32.gmra.mrb[0].mxu0 %v754
    %v827 = vpop.f32.mrb[0].mxu0
    %v828 = vadd.f32 %v748, %v827
    %v829 = vpop.f32.mrb[0].mxu0
    %830 = vdwg.mxu0
    %v831 = vmul.f32 %v823, 1.702
    %v832 = vmul.f32 %v828, 1.702
    %v833 = vxor.u32 %v831, 2147483648
    %v834 = vxor.u32 %v832, 2147483648
    %v835 = vmul.f32 %v833, 1.442695
    %v836 = vpow.pop %v835
    %v837 = vmul.f32 %v834, 1.442695
    %v838 = vpow.pop %v837
    %v839 = vadd.f32 %v836, 1.0
    %v840 = vadd.f32 %v838, 1.0
    %v841 = vrcp.pop %v839
    %v842 = vmul.f32 1.0, %v841
    %v843 = vrcp.pop %v840
    %v844 = vmul.f32 1.0, %v843
    %v845 = vmul.f32 %v823, %v842
    %v846 = vmul.f32 %v828, %v844
    %v847 = vld [vmem:[%s11] sm:$0xff]
    %v848 = vld [vmem:[%s11 + $0x8] sm:$0xff]
    %v849 = vld [vmem:[%s11 + $0x10] sm:$0xff]
    %v850 = vld [vmem:[%s11 + $0x18] sm:$0xff]
    %v851 = vld [vmem:[%s11 + $0x20] sm:$0xff]
    %v852 = vld [vmem:[%s11 + $0x28] sm:$0xff]
    %v853 = vld [vmem:[%s11 + $0x30] sm:$0xff]
    %v854 = vld [vmem:[%s11 + $0x38] sm:$0xff]
    %v855 = vld [vmem:[%s11 + $0x40] sm:$0xff]
    %v856 = vld [vmem:[%s11 + $0x48] sm:$0xff]
    %v857 = vld [vmem:[%s11 + $0x50] sm:$0xff]
    %v858 = vld [vmem:[%s11 + $0x58] sm:$0xff]
    %v859 = vld [vmem:[%s11 + $0x60] sm:$0xff]
    %v860 = vld [vmem:[%s11 + $0x68] sm:$0xff]
    %v861 = vld [vmem:[%s11 + $0x70] sm:$0xff]
    %v862 = vld [vmem:[%s11 + $0x78] sm:$0xff]
    %v863 = vld [vmem:[%s12] sm:$0x1]
    %v865 = vlaneseq
    %v866 = vshrl.u32 %v865, 7
    %v867 = vsub.s32 0, %v866
    %v868 = vrot.slane %v863, %v867
    %870 = vmatprep.subr.mxu0 0.0
    %871 = vmatpush1.msra.mxu0 %v847
    %872 = vmatprep.subr.mxu0 0.0
    %873 = vmatpush1.msra.mxu0 %v848
    %874 = vmatprep.subr.mxu0 0.0
    %875 = vmatpush1.msra.mxu0 %v849
    %876 = vmatprep.subr.mxu0 0.0
    %877 = vmatpush1.msra.mxu0 %v850
    %878 = vmatprep.subr.mxu0 0.0
    %879 = vmatpush1.msra.mxu0 %v851
    %880 = vmatprep.subr.mxu0 0.0
    %881 = vmatpush1.msra.mxu0 %v852
    %882 = vmatprep.subr.mxu0 0.0
    %883 = vmatpush1.msra.mxu0 %v853
    %884 = vmatprep.subr.mxu0 0.0
    %885 = vmatpush1.msra.mxu0 %v854
    %886 = vmatprep.subr.mxu0 0.0
    %887 = vmatpush1.msra.mxu0 %v855
    %888 = vmatprep.subr.mxu0 0.0
    %889 = vmatpush1.msra.mxu0 %v856
    %890 = vmatprep.subr.mxu0 0.0
    %891 = vmatpush1.msra.mxu0 %v857
    %892 = vmatprep.subr.mxu0 0.0
    %893 = vmatpush1.msra.mxu0 %v858
    %894 = vmatprep.subr.mxu0 0.0
    %895 = vmatpush1.msra.mxu0 %v859
    %896 = vmatprep.subr.mxu0 0.0
    %897 = vmatpush1.msra.mxu0 %v860
    %898 = vmatprep.subr.mxu0 0.0
    %899 = vmatpush1.msra.mxu0 %v861
    %900 = vmatprep.subr.mxu0 0.0
    %901 = vmatpush1.msra.mxu0 %v862
    %902 = vmatprep.subr.mxu0 0.0
    %903 = vmatpush1.msra.mxu0 0.0
    %904 = vmatprep.subr.mxu0 0.0
    %905 = vmatpush1.msra.mxu0 0.0
    %906 = vmatprep.subr.mxu0 0.0
    %907 = vmatpush1.msra.mxu0 0.0
    %908 = vmatprep.subr.mxu0 0.0
    %909 = vmatpush1.msra.mxu0 0.0
    %910 = vmatprep.subr.mxu0 0.0
    %911 = vmatpush1.msra.mxu0 0.0
    %912 = vmatprep.subr.mxu0 0.0
    %913 = vmatpush1.msra.mxu0 0.0
    %914 = vmatprep.subr.mxu0 0.0
    %915 = vmatpush1.msra.mxu0 0.0
    %916 = vmatprep.subr.mxu0 0.0
    %917 = vmatpush1.msra.mxu0 0.0
    %918 = vmatprep.subr.mxu0 0.0
    %919 = vmatpush1.msra.mxu0 0.0
    %920 = vmatprep.subr.mxu0 0.0
    %921 = vmatpush1.msra.mxu0 0.0
    %922 = vmatprep.subr.mxu0 0.0
    %923 = vmatpush1.msra.mxu0 0.0
    %924 = vmatprep.subr.mxu0 0.0
    %925 = vmatpush1.msra.mxu0 0.0
    %926 = vmatprep.subr.mxu0 0.0
    %927 = vmatpush1.msra.mxu0 0.0
    %928 = vmatprep.subr.mxu0 0.0
    %929 = vmatpush1.msra.mxu0 0.0
    %930 = vmatprep.subr.mxu0 0.0
    %931 = vmatpush1.msra.mxu0 0.0
    %932 = vmatprep.subr.mxu0 0.0
    %933 = vmatpush1.msra.mxu0 0.0
    %934 = vmatprep.mubr.f32.mxu0 0.0
    %935 = vmatmul.mubr.f32.gmra.mrb[0].mxu0 %v845
    %v936 = vpop.f32.mrb[0].mxu0
    %v937 = vadd.f32 %v868, %v936
    %v938 = vpop.f32.mrb[0].mxu0
    %939 = vmatprep.mubr.f32.mxu0 0.0
    %940 = vmatmul.mubr.f32.gmra.mrb[0].mxu0 %v846
    %v941 = vpop.f32.mrb[0].mxu0
    %v942 = vadd.f32 %v868, %v941
    %v943 = vpop.f32.mrb[0].mxu0
    %944 = vdwg.mxu0
    %v945 = vadd.f32 %v693, %v937
    %v946 = vadd.f32 %v694, %v942
    %947 = vst.msk [vmem:[#allocation2] sm:$0xff] %vm55, %v945
    %948 = vst.msk [vmem:[#allocation2 + $0x8] sm:$0xff] %vm55, %v946
    // Predicated region
    $region62: #{residual_attention_block.1} parent=1 // pred_check
      _
    $region63: #{residual_attention_block.1} parent=1 // pred_check_branch
      %950 = sbr.rel (0) target = $region65
    $region64: #{residual_attention_block.1} parent=1 // pred_region
      %s952 = ssub.s32 256, 256
      %953 = vsyncadd [#allocation3], %s952
      %s954 = sshll.u32 [#allocation2], 4
      %s955 = int_to_ptr.vmem [resolvable:$true] %s954
      %960 = dma.vmem_to_hbm [thread:$0]  %s955, 256, %s15, [#allocation3], 128, 128, 8
    $region65: #{residual_attention_block.1} parent=1 // pred_fallthru
      _
    // Predicated region
    $region66: #{residual_attention_block.1} parent=1 // pred_check
      _
    $region67: #{residual_attention_block.1} parent=1 // pred_check_branch
      %962 = sbr.rel (0) target = $region69
    $region68: #{residual_attention_block.1} parent=1 // pred_region
      %963 = dma.done [#allocation3], 256
    $region69: #{residual_attention_block.1} parent=1 // pred_fallthru
      _
    %964 = vsyncpa [#allocation3], 1

</llo_original>
